<compile_context>
chip_gen: v6e
topology: v6e:2x2x1
jax: 0.10.0
libtpu: 0.0.40
codegen_flags: <defaults>
</compile_context>

<pallas_src>
import jax
import jax.numpy as jnp
from jax.experimental import pallas as pl
from jax.experimental.pallas import tpu as pltpu

NEG_SLOPE = 0.01   # torch.nn.LeakyReLU default negative_slope
BN_EPS = 1e-5      # torch.nn.BatchNorm2d default eps


# ---------------------------------------------------------------------------
# Pallas kernel: one MXU matmul (folded upsample+conv+BN+bias) + LeakyReLU.
# ---------------------------------------------------------------------------
def upsample_block_kernel(w_ref, x_ref, o_ref):
    """o = LeakyReLU(W @ X) for one lane-dense block of pixels.

    w_ref: VMEM f32[4*Cout, Cin*9+1]   folded phase weights (+ bias column)
    x_ref: VMEM f32[Cin*9+1, block_m]  im2col block (last row == 1.0 for bias)
    o_ref: VMEM f32[4*Cout, block_m]   phase-major output block
    """
    acc = jnp.dot(w_ref[...], x_ref[...], preferred_element_type=jnp.float32)
    o_ref[...] = jnp.where(acc >= 0.0, acc, NEG_SLOPE * acc)


# ---------------------------------------------------------------------------
# Algebraic fold: nearest-2x upsample + 3x3 conv + eval-BN -> one matrix.
# ---------------------------------------------------------------------------
def _fold_taps(v, axis, parity):
    """Fold the 3 conv taps along `axis` onto the 3 padded-offset taps that an
    output row/column of the given parity reads after nearest-2x upsampling.
    Exact element-wise adds only (no matmul rounding)."""
    t0, t1, t2 = jnp.split(v, 3, axis=axis)
    zero = jnp.zeros_like(t0)
    taps = (t0, t1 + t2, zero) if parity == 0 else (zero, t0 + t1, t2)
    return jnp.concatenate(taps, axis=axis)


def fold_upsample_conv_bn(conv_w, conv_b, bn_gamma, bn_beta, bn_mean, bn_var,
                          eps=BN_EPS):
    """Fold upsample(2x nearest) + conv3x3(pad=1) + BN(eval) into a single
    [4*Cout, Cin*9 + 1] matrix (last column = folded bias)."""
    cout, cin, _, _ = conv_w.shape
    scale = bn_gamma / jnp.sqrt(bn_var + eps)                        # [Cout]
    w_bn = conv_w * scale[:, None, None, None]                       # [Cout,Cin,3,3]
    b_f = (conv_b - bn_mean) * scale + bn_beta                       # [Cout]
    # w9[a, b, co, ci, ty, tx]: weight applied to padded-input tap (i+ty, j+tx)
    # for the output pixel at parities (row % 2, col % 2) = (a, b).
    w9 = jnp.stack([
        jnp.stack([_fold_taps(_fold_taps(w_bn, 2, a), 3, b) for b in range(2)])
        for a in range(2)])                                          # [2,2,Cout,Cin,3,3]
    w_mat = w9.reshape(4 * cout, cin * 9)
    bias_col = jnp.tile(b_f, 4)[:, None]                             # row r -> b_f[r % Cout]
    return jnp.concatenate([w_mat, bias_col], axis=1)                # [4*Cout, Cin*9+1]


def im2col(x):
    """[B, Cin, H, W] -> [Cin*9 + 1, B*H*W] lane-dense im2col (last row = ones)."""
    b, cin, h, w = x.shape
    xp = jnp.pad(x, ((0, 0), (0, 0), (1, 1), (1, 1)))
    taps = [xp[:, :, ty:ty + h, tx:tx + w] for ty in range(3) for tx in range(3)]
    xcol = jnp.stack(taps, axis=2)                                   # [B, Cin, 9, H, W]
    xcol = xcol.transpose(1, 2, 0, 3, 4).reshape(cin * 9, b * h * w)
    ones = jnp.ones((1, b * h * w), x.dtype)
    return jnp.concatenate([xcol, ones], axis=0)


def _phases_to_nchw(phases, b, cout, h, w):
    """[4*Cout, B*H*W] phase-major -> [B, Cout, 2H, 2W] (pixel shuffle)."""
    phases = phases.reshape(2, 2, cout, b, h, w)
    return jnp.transpose(phases, (3, 2, 4, 0, 5, 1)).reshape(b, cout, 2 * h, 2 * w)


def _pick_block_m(m):
    """Largest lane-dense (multiple-of-128) block that divides M."""
    for cand in (2048, 1024, 512, 256, 128):
        if m % cand == 0:
            return cand
    return m   # single full-extent block (allowed even if not 128-aligned)


@jax.jit
def upsample_block_forward(x, conv_w, conv_b, bn_gamma, bn_beta, bn_mean, bn_var):
    """x: [B, Cin, H, W] f32 -> [B, Cout, 2H, 2W] f32 (UpSampleBlock forward, eval BN)."""
    b, cin, h, w = x.shape
    cout = conv_w.shape[0]
    m = b * h * w
    k = cin * 9 + 1

    w_full = fold_upsample_conv_bn(conv_w, conv_b, bn_gamma, bn_beta, bn_mean, bn_var)
    x_col = im2col(x)
    block_m = _pick_block_m(m)

    phases = pl.pallas_call(
        upsample_block_kernel,
        out_shape=jax.ShapeDtypeStruct((4 * cout, m), jnp.float32),
        grid=(m // block_m,),
        in_specs=[
            pl.BlockSpec((4 * cout, k), lambda i: (0, 0)),   # folded weights (resident)
            pl.BlockSpec((k, block_m), lambda i: (0, i)),    # im2col pixel block
        ],
        out_specs=pl.BlockSpec((4 * cout, block_m), lambda i: (0, i)),
        compiler_params=pltpu.CompilerParams(
            dimension_semantics=("parallel",)),
    )(w_full, x_col)

    return _phases_to_nchw(phases, b, cout, h, w)


if __name__ == "__main__":
    B, CIN, COUT, H, W = 2, 4, 8, 16, 16

    key = jax.random.PRNGKey(0)
    kx, kw, kb, kg, kbe, km, kv = jax.random.split(key, 7)

    x = jax.random.normal(kx, (B, CIN, H, W), dtype=jnp.float32)

    bound = 1.0 / (CIN * 9) ** 0.5                 # torch Conv2d default init bound
    conv_w = jax.random.uniform(kw, (COUT, CIN, 3, 3), jnp.float32, -bound, bound)
    conv_b = jax.random.uniform(kb, (COUT,), jnp.float32, -bound, bound)
    bn_gamma = jax.random.uniform(kg, (COUT,), jnp.float32, 0.5, 1.5)
    bn_beta = 0.1 * jax.random.normal(kbe, (COUT,), jnp.float32)
    bn_mean = 0.1 * jax.random.normal(km, (COUT,), jnp.float32)
    bn_var = jax.random.uniform(kv, (COUT,), jnp.float32, 0.5, 1.5)

    out = upsample_block_forward(x, conv_w, conv_b, bn_gamma, bn_beta, bn_mean, bn_var)
    out = jax.block_until_ready(out)
    assert out.shape == (B, COUT, 2 * H, 2 * W)

    # ---- Validation --------------------------------------------------------
    hp = jax.lax.Precision.HIGHEST

    # (1) Module reference: upsample(nearest 2x) -> conv3x3(pad=1) -> BN(eval)
    #     -> LeakyReLU, at HIGHEST precision so it is ~exact f32.
    up = jnp.repeat(jnp.repeat(x, 2, axis=2), 2, axis=3)
    conv = jax.lax.conv_general_dilated(
        up, conv_w, window_strides=(1, 1), padding=((1, 1), (1, 1)),
        dimension_numbers=("NCHW", "OIHW", "NCHW"), precision=hp)
    conv = conv + conv_b[None, :, None, None]
    bn = ((conv - bn_mean[None, :, None, None])
          / jnp.sqrt(bn_var[None, :, None, None] + BN_EPS)
          * bn_gamma[None, :, None, None] + bn_beta[None, :, None, None])
    ref = jnp.where(bn >= 0.0, bn, NEG_SLOPE * bn)

    # (2) Exact XLA twin of the kernel (same folded weights / im2col / epilogue,
    #     HIGHEST-precision dot): validates the algebraic fold tightly,
    #     independent of MXU pass-decomposition rounding.
    w_full = fold_upsample_conv_bn(conv_w, conv_b, bn_gamma, bn_beta, bn_mean, bn_var)
    x_col = im2col(x)
    twin = jnp.dot(w_full, x_col, precision=hp)
    twin = jnp.where(twin >= 0.0, twin, NEG_SLOPE * twin)
    twin = _phases_to_nchw(twin, B, COUT, H, W)

    err_fold = float(jnp.max(jnp.abs(twin - ref)))
    assert err_fold < 1e-4, f"fold/im2col algebra mismatch: {err_fold}"

    # Kernel vs its exact twin: only MXU f32 pass-decomposition rounding may
    # differ (observed error is ~1e-6; tolerance leaves bf16-pass headroom).
    err_mxu = float(jnp.max(jnp.abs(out - twin)))
    assert err_mxu < 2e-2, f"kernel vs folded-matmul twin mismatch: {err_mxu}"

    # End-to-end sanity check.
    err_total = float(jnp.max(jnp.abs(out - ref)))
    assert err_total < 2e-2, f"kernel vs module reference mismatch: {err_total}"

    print("KERNEL_OK")
</pallas_src>

<mosaic_0001>
module attributes {stable_mosaic.version = 11 : i64} {
  func.func @upsample_block_kernel(%arg0: i32, %arg1: memref<32x37xf32, #tpu.memory_space<vmem>>, %arg2: memref<37x512xf32, #tpu.memory_space<vmem>>, %arg3: memref<32x512xf32, #tpu.memory_space<vmem>>) attributes {dimension_semantics = [#tpu.dimension_semantics<parallel>], iteration_bounds = array<i64: 1>, scalar_prefetch = 0 : i64, scratch_operands = 0 : i64, tpu.core_type = #tpu.core_type<tc>, window_params = [{pipeline_mode = #tpu.pipeline_mode<synchronous>, transform_indices = @transform_0, window_bounds = array<i64: 32, 37>}, {transform_indices = @transform_1, window_bounds = array<i64: 37, 512>}, {transform_indices = @transform_2, window_bounds = array<i64: 32, 512>}]} {
    %c0 = arith.constant 0 : index
    %c0_0 = arith.constant 0 : index
    %0 = vector.load %arg1[%c0, %c0_0] : memref<32x37xf32, #tpu.memory_space<vmem>>, vector<32x37xf32>
    %c0_1 = arith.constant 0 : index
    %c0_2 = arith.constant 0 : index
    %1 = vector.load %arg2[%c0_1, %c0_2] : memref<37x512xf32, #tpu.memory_space<vmem>>, vector<37x512xf32>
    %cst = arith.constant dense<0.000000e+00> : vector<32x512xf32>
    %2 = tpu.matmul %0, %1, %cst {dimension_numbers = #tpu.dot_dimension_numbers<[1], [0], [0], [1], [0, 0, 1, 1], [], []>} : vector<32x37xf32>, vector<37x512xf32>, vector<32x512xf32> -> vector<32x512xf32>
    %cst_3 = arith.constant 0.000000e+00 : f32
    %3 = vector.broadcast %cst_3 : f32 to vector<32x512xf32>
    %4 = arith.cmpf oge, %2, %3 : vector<32x512xf32>
    %cst_4 = arith.constant 0.00999999977 : f32
    %5 = vector.broadcast %cst_4 : f32 to vector<32x512xf32>
    %6 = arith.mulf %5, %2 : vector<32x512xf32>
    %7 = arith.select %4, %2, %6 : vector<32x512xi1>, vector<32x512xf32>
    %c0_5 = arith.constant 0 : index
    %c0_6 = arith.constant 0 : index
    %8 = vector.load %arg3[%c0_5, %c0_6] : memref<32x512xf32, #tpu.memory_space<vmem>>, vector<32x512xf32>
    tpu.vector_store %arg3[%c0_5, %c0_6], %7 {strides = array<i32>} : memref<32x512xf32, #tpu.memory_space<vmem>>, vector<32x512xf32>,
    return
  }
  func.func @transform_0(%arg0: i32) -> (i32, i32) {
    %c0_i32 = arith.constant 0 : i32
    %c0_i32_0 = arith.constant 0 : i32
    %c0_i32_1 = arith.constant 0 : i32
    return %c0_i32, %c0_i32_0 : i32, i32
  }
  func.func @transform_1(%arg0: i32) -> (i32, i32) {
    %c0_i32 = arith.constant 0 : i32
    %c0_i32_0 = arith.constant 0 : i32
    return %c0_i32, %arg0 : i32, i32
  }
  func.func @transform_2(%arg0: i32) -> (i32, i32) {
    %c0_i32 = arith.constant 0 : i32
    %c0_i32_0 = arith.constant 0 : i32
    return %c0_i32, %arg0 : i32, i32
  }
}

</mosaic_0001>

<llo_original>
// kernel: tile.8
$region0: #{tile.8}
  #allocation0 [shape = 's32[1]{0}', space=sflag, size = 0x4, scoped, tag = 'scoped memory for tile.8']
  %s0 = inlined_call_operand.vmem [shape: f32[8], index: 0, kind: input, shape index: {}]
  %s1 = inlined_call_operand.vmem [shape: f32[4,8], index: 1, kind: output, shape index: {}]
  // Predicated region
  $region2: #{tile.8} parent=0 // pred_check
    _
  $region3: #{tile.8} parent=0 // pred_check_branch
    %3 = sbr.rel (0) target = $region5
  $region4: #{tile.8} parent=0 // pred_region
    _
  $region5: #{tile.8} parent=0 // pred_fallthru
    _
  %v4 = vld [vmem:[%s0] ss:$0 sm:$0xff]
  %5 = vst [vmem:[%s1] sm:$0xf] %v4

// kernel: tile.0
$region0: #{tile.0}
  %s0 = inlined_call_operand.vmem [shape: f32[4,8], index: 0, kind: input, shape index: {}]
  %s1 = inlined_call_operand.vmem [shape: f32[32,1], index: 1, kind: output, shape index: {}]
  $region1: #{tile.0} parent=0
    #allocation0 [shape = 'u8[4096]{0}', space=vmem, size = 0x1000, scoped, tag = 'scoped mem for input reshape']
    %s3 = sshll.u32 1, 4
    %s4 = ssub.s32 %s3, 1
    %v5 = vld [vmem:[%s0] sm:%s4]
    %6 = vst [vmem:[#allocation0] sm:%s4] %v5
    %v7 = vld [vmem:[#allocation0] sm:$0xf]
    %vm8 = vcmask 7168
    %9 = vst.msk [vmem:[%s1] ss:$8 sm:$0xf] %vm8, %v7
    %v10 = vld [vmem:[#allocation0] sm:$0xf]
    %11 = vrot.lane.b32.xlu0 %v10, 127
    %v12 = vpop.permute.xlu0 %11
    %vm13 = vcmask 7168
    %s14 = scalar_lea.vmem %s1, 1
    %15 = vst.msk [vmem:[%s14] ss:$8 sm:$0xf] %vm13, %v12
    %v16 = vld [vmem:[#allocation0] sm:$0xf]
    %17 = vrot.lane.b32.xlu0 %v16, 126
    %v18 = vpop.permute.xlu0 %17
    %vm19 = vcmask 7168
    %s20 = scalar_lea.vmem %s1, 2
    %21 = vst.msk [vmem:[%s20] ss:$8 sm:$0xf] %vm19, %v18
    %v22 = vld [vmem:[#allocation0] sm:$0xf]
    %23 = vrot.lane.b32.xlu0 %v22, 125
    %v24 = vpop.permute.xlu0 %23
    %vm25 = vcmask 7168
    %s26 = scalar_lea.vmem %s1, 3
    %27 = vst.msk [vmem:[%s26] ss:$8 sm:$0xf] %vm25, %v24
    %v28 = vld [vmem:[#allocation0] sm:$0xf]
    %29 = vrot.lane.b32.xlu0 %v28, 124
    %v30 = vpop.permute.xlu0 %29
    %vm31 = vcmask 7168
    %s32 = scalar_lea.vmem %s1, 4
    %33 = vst.msk [vmem:[%s32] ss:$8 sm:$0xf] %vm31, %v30
    %v34 = vld [vmem:[#allocation0] sm:$0xf]
    %35 = vrot.lane.b32.xlu0 %v34, 123
    %v36 = vpop.permute.xlu0 %35
    %vm37 = vcmask 7168
    %s38 = scalar_lea.vmem %s1, 5
    %39 = vst.msk [vmem:[%s38] ss:$8 sm:$0xf] %vm37, %v36
    %v40 = vld [vmem:[#allocation0] sm:$0xf]
    %41 = vrot.lane.b32.xlu0 %v40, 122
    %v42 = vpop.permute.xlu0 %41
    %vm43 = vcmask 7168
    %s44 = scalar_lea.vmem %s1, 6
    %45 = vst.msk [vmem:[%s44] ss:$8 sm:$0xf] %vm43, %v42
    %v46 = vld [vmem:[#allocation0] sm:$0xf]
    %47 = vrot.lane.b32.xlu0 %v46, 121
    %v48 = vpop.permute.xlu0 %47
    %vm49 = vcmask 7168
    %s50 = scalar_lea.vmem %s1, 7
    %51 = vst.msk [vmem:[%s50] ss:$8 sm:$0xf] %vm49, %v48

// kernel: upsample_block_forward.1
$region0: #{upsample_block_forward.1}
  #allocation0 [shape = 'u32[]', space=smem, size = 0x4, offset = 0x4, fixed_abs, tag = 'smem constant byte address 0x4 - core index']
  #allocation1 [shape = 'u32[144,128]{1,0:T(1,128)}', space=vmem, size = 0x12000, scoped, tag = 'internal scratch']
  %s0 = inlined_call_operand.vmem [shape: f32[32,37], index: 0, kind: input, shape index: {}]
  %s1 = inlined_call_operand.vmem [shape: f32[37,512], index: 1, kind: input, shape index: {}]
  %s2 = inlined_call_operand.vmem [shape: f32[32,512], index: 2, kind: output, shape index: {}]
  %s3 = sld [smem:[#allocation0]]
  $region18: #{upsample_block_forward.1} parent=0
    _
  %s5 = ssub.s32 1, %s3
  %s6 = scalar_select 0, %s5, %s3
  // Predicated region
  $region2: #{upsample_block_forward.1} parent=0 // pred_check
    _
  $region3: #{upsample_block_forward.1} parent=0 // pred_check_branch
    %8 = sbr.rel (0) target = $region5
  $region4: #{upsample_block_forward.1} parent=0 // pred_region
    _
  $region5: #{upsample_block_forward.1} parent=0 // pred_fallthru
    _
  // Predicated region
  $region6: #{upsample_block_forward.1} parent=0 // pred_check
    _
  $region7: #{upsample_block_forward.1} parent=0 // pred_check_branch
    %10 = sbr.rel (0) target = $region9
  $region8: #{upsample_block_forward.1} parent=0 // pred_region
    _
  $region9: #{upsample_block_forward.1} parent=0 // pred_fallthru
    _
  %v11 = vld [vmem:[%s0] sm:$0xff]
  %v12 = vld [vmem:[%s0 + $0x8] sm:$0xff]
  %v13 = vld [vmem:[%s0 + $0x10] sm:$0xff]
  %v14 = vld [vmem:[%s0 + $0x18] sm:$0xff]
  %v15 = vld [vmem:[%s1] sm:$0xff]
  %v16 = vld [vmem:[%s1 + $0x8] sm:$0xff]
  %v17 = vld [vmem:[%s1 + $0x10] sm:$0xff]
  %v18 = vld [vmem:[%s1 + $0x18] sm:$0xff]
  %v19 = vld [vmem:[%s1 + $0x20] sm:$0xff]
  %v20 = vld [vmem:[%s1 + $0x28] sm:$0xff]
  %v21 = vld [vmem:[%s1 + $0x30] sm:$0xff]
  %v22 = vld [vmem:[%s1 + $0x38] sm:$0xff]
  %v23 = vld [vmem:[%s1 + $0x40] sm:$0xff]
  %v24 = vld [vmem:[%s1 + $0x48] sm:$0xff]
  %v25 = vld [vmem:[%s1 + $0x50] sm:$0xff]
  %v26 = vld [vmem:[%s1 + $0x58] sm:$0xff]
  %v27 = vld [vmem:[%s1 + $0x60] sm:$0xff]
  %v28 = vld [vmem:[%s1 + $0x68] sm:$0xff]
  %v29 = vld [vmem:[%s1 + $0x70] sm:$0xff]
  %v30 = vld [vmem:[%s1 + $0x78] sm:$0xff]
  %v31 = vld [vmem:[%s1 + $0x80] sm:$0x1f]
  %v32 = vld [vmem:[%s1 + $0x88] sm:$0x1f]
  %v33 = vld [vmem:[%s1 + $0x90] sm:$0x1f]
  %v34 = vld [vmem:[%s1 + $0x98] sm:$0x1f]
  %vm35 = vcmask 302080
  %v37 = vsel %vm35, %v11, 0
  %v40 = vsel %vm35, %v12, 0
  %v43 = vsel %vm35, %v13, 0
  %v46 = vsel %vm35, %v14, 0
  %vm48 = vcmask 1044480
  %v50 = vsel %vm48, %v31, 0
  %v53 = vsel %vm48, %v32, 0
  %v56 = vsel %vm48, %v33, 0
  %v59 = vsel %vm48, %v34, 0
  %61 = vmatprep.subr.mxu0 0.0
  %62 = vmatpush1.msra.mxu0 0.0
  %63 = vmatprep.subr.mxu0 0.0
  %64 = vmatpush1.msra.mxu0 0.0
  %65 = vmatprep.subr.mxu0 0.0
  %66 = vmatpush1.msra.mxu0 0.0
  %67 = vmatprep.subr.mxu0 0.0
  %68 = vmatpush1.msra.mxu0 0.0
  %69 = vmatprep.subr.mxu0 0.0
  %70 = vmatpush1.msra.mxu0 0.0
  %71 = vmatprep.subr.mxu0 0.0
  %72 = vmatpush1.msra.mxu0 0.0
  %73 = vmatprep.subr.mxu0 0.0
  %74 = vmatpush1.msra.mxu0 0.0
  %75 = vmatprep.subr.mxu0 0.0
  %76 = vmatpush1.msra.mxu0 0.0
  %77 = vmatprep.subr.mxu0 0.0
  %78 = vmatpush1.msra.mxu0 0.0
  %79 = vmatprep.subr.mxu0 0.0
  %80 = vmatpush1.msra.mxu0 0.0
  %81 = vmatprep.subr.mxu0 0.0
  %82 = vmatpush1.msra.mxu0 0.0
  %83 = vmatprep.subr.mxu0 %v53
  %84 = vmatpush1.msra.mxu0 %v50
  %85 = vmatprep.subr.mxu0 %v28
  %86 = vmatpush1.msra.mxu0 %v27
  %87 = vmatprep.subr.mxu0 %v24
  %88 = vmatpush1.msra.mxu0 %v23
  %89 = vmatprep.subr.mxu0 %v20
  %90 = vmatpush1.msra.mxu0 %v19
  %91 = vmatprep.subr.mxu0 %v16
  %92 = vmatpush1.msra.mxu0 %v15
  %93 = vmatprep.subr.mxu0 0.0
  %94 = vmatpush2.msra.mxu0 0.0
  %95 = vmatprep.subr.mxu0 0.0
  %96 = vmatpush2.msra.mxu0 0.0
  %97 = vmatprep.subr.mxu0 0.0
  %98 = vmatpush2.msra.mxu0 0.0
  %99 = vmatprep.subr.mxu0 0.0
  %100 = vmatpush2.msra.mxu0 0.0
  %101 = vmatprep.subr.mxu0 0.0
  %102 = vmatpush2.msra.mxu0 0.0
  %103 = vmatprep.subr.mxu0 0.0
  %104 = vmatpush2.msra.mxu0 0.0
  %105 = vmatprep.subr.mxu0 0.0
  %106 = vmatpush2.msra.mxu0 0.0
  %107 = vmatprep.subr.mxu0 0.0
  %108 = vmatpush2.msra.mxu0 0.0
  %109 = vmatprep.subr.mxu0 0.0
  %110 = vmatpush2.msra.mxu0 0.0
  %111 = vmatprep.subr.mxu0 0.0
  %112 = vmatpush2.msra.mxu0 0.0
  %113 = vmatprep.subr.mxu0 0.0
  %114 = vmatpush2.msra.mxu0 0.0
  %115 = vmatprep.subr.mxu0 0.0
  %116 = vmatpush2.msra.mxu0 0.0
  %117 = vmatprep.subr.mxu0 0.0
  %118 = vmatpush2.msra.mxu0 0.0
  %119 = vmatprep.subr.mxu0 0.0
  %120 = vmatpush2.msra.mxu0 0.0
  %121 = vmatprep.subr.mxu0 0.0
  %122 = vmatpush2.msra.mxu0 0.0
  %123 = vmatprep.subr.mxu0 0.0
  %124 = vmatpush2.msra.mxu0 0.0
  %125 = vmatprep.mubr.f32.mxu0 0.0
  %126 = vmatmul.mubr.f32.gmra.mxu0 %v37
  %v127 = vpop.f32.mrf.mxu0
  %v128 = vadd.f32 0.0, %v127
  %v129 = vpop.f32.mrf.mxu0
  %v130 = vadd.f32 0.0, %v129
  %131 = vmatprep.mubr.f32.mxu0 0.0
  %132 = vmatmul.mubr.f32.gmra.mxu0 %v40
  %v133 = vpop.f32.mrf.mxu0
  %v134 = vadd.f32 0.0, %v133
  %v135 = vpop.f32.mrf.mxu0
  %v136 = vadd.f32 0.0, %v135
  %137 = vmatprep.mubr.f32.mxu0 0.0
  %138 = vmatmul.mubr.f32.gmra.mxu0 %v43
  %v139 = vpop.f32.mrf.mxu0
  %v140 = vadd.f32 0.0, %v139
  %v141 = vpop.f32.mrf.mxu0
  %v142 = vadd.f32 0.0, %v141
  %143 = vmatprep.mubr.f32.mxu0 0.0
  %144 = vmatmul.mubr.f32.gmra.mxu0 %v46
  %v145 = vpop.f32.mrf.mxu0
  %v146 = vadd.f32 0.0, %v145
  %v147 = vpop.f32.mrf.mxu0
  %v148 = vadd.f32 0.0, %v147
  %149 = vdwg.mxu0
  %150 = vmatprep.subr.mxu0 0.0
  %151 = vmatpush1.msra.mxu0 0.0
  %152 = vmatprep.subr.mxu0 0.0
  %153 = vmatpush1.msra.mxu0 0.0
  %154 = vmatprep.subr.mxu0 0.0
  %155 = vmatpush1.msra.mxu0 0.0
  %156 = vmatprep.subr.mxu0 0.0
  %157 = vmatpush1.msra.mxu0 0.0
  %158 = vmatprep.subr.mxu0 0.0
  %159 = vmatpush1.msra.mxu0 0.0
  %160 = vmatprep.subr.mxu0 0.0
  %161 = vmatpush1.msra.mxu0 0.0
  %162 = vmatprep.subr.mxu0 0.0
  %163 = vmatpush1.msra.mxu0 0.0
  %164 = vmatprep.subr.mxu0 0.0
  %165 = vmatpush1.msra.mxu0 0.0
  %166 = vmatprep.subr.mxu0 0.0
  %167 = vmatpush1.msra.mxu0 0.0
  %168 = vmatprep.subr.mxu0 0.0
  %169 = vmatpush1.msra.mxu0 0.0
  %170 = vmatprep.subr.mxu0 0.0
  %171 = vmatpush1.msra.mxu0 0.0
  %172 = vmatprep.subr.mxu0 %v59
  %173 = vmatpush1.msra.mxu0 %v56
  %174 = vmatprep.subr.mxu0 %v30
  %175 = vmatpush1.msra.mxu0 %v29
  %176 = vmatprep.subr.mxu0 %v26
  %177 = vmatpush1.msra.mxu0 %v25
  %178 = vmatprep.subr.mxu0 %v22
  %179 = vmatpush1.msra.mxu0 %v21
  %180 = vmatprep.subr.mxu0 %v18
  %181 = vmatpush1.msra.mxu0 %v17
  %182 = vmatprep.subr.mxu0 0.0
  %183 = vmatpush2.msra.mxu0 0.0
  %184 = vmatprep.subr.mxu0 0.0
  %185 = vmatpush2.msra.mxu0 0.0
  %186 = vmatprep.subr.mxu0 0.0
  %187 = vmatpush2.msra.mxu0 0.0
  %188 = vmatprep.subr.mxu0 0.0
  %189 = vmatpush2.msra.mxu0 0.0
  %190 = vmatprep.subr.mxu0 0.0
  %191 = vmatpush2.msra.mxu0 0.0
  %192 = vmatprep.subr.mxu0 0.0
  %193 = vmatpush2.msra.mxu0 0.0
  %194 = vmatprep.subr.mxu0 0.0
  %195 = vmatpush2.msra.mxu0 0.0
  %196 = vmatprep.subr.mxu0 0.0
  %197 = vmatpush2.msra.mxu0 0.0
  %198 = vmatprep.subr.mxu0 0.0
  %199 = vmatpush2.msra.mxu0 0.0
  %200 = vmatprep.subr.mxu0 0.0
  %201 = vmatpush2.msra.mxu0 0.0
  %202 = vmatprep.subr.mxu0 0.0
  %203 = vmatpush2.msra.mxu0 0.0
  %204 = vmatprep.subr.mxu0 0.0
  %205 = vmatpush2.msra.mxu0 0.0
  %206 = vmatprep.subr.mxu0 0.0
  %207 = vmatpush2.msra.mxu0 0.0
  %208 = vmatprep.subr.mxu0 0.0
  %209 = vmatpush2.msra.mxu0 0.0
  %210 = vmatprep.subr.mxu0 0.0
  %211 = vmatpush2.msra.mxu0 0.0
  %212 = vmatprep.subr.mxu0 0.0
  %213 = vmatpush2.msra.mxu0 0.0
  %214 = vmatprep.mubr.f32.mxu0 0.0
  %215 = vmatmul.mubr.f32.gmra.mxu0 %v37
  %v216 = vpop.f32.mrf.mxu0
  %v217 = vadd.f32 0.0, %v216
  %v218 = vpop.f32.mrf.mxu0
  %v219 = vadd.f32 0.0, %v218
  %220 = vmatprep.mubr.f32.mxu0 0.0
  %221 = vmatmul.mubr.f32.gmra.mxu0 %v40
  %v222 = vpop.f32.mrf.mxu0
  %v223 = vadd.f32 0.0, %v222
  %v224 = vpop.f32.mrf.mxu0
  %v225 = vadd.f32 0.0, %v224
  %226 = vmatprep.mubr.f32.mxu0 0.0
  %227 = vmatmul.mubr.f32.gmra.mxu0 %v43
  %v228 = vpop.f32.mrf.mxu0
  %v229 = vadd.f32 0.0, %v228
  %v230 = vpop.f32.mrf.mxu0
  %v231 = vadd.f32 0.0, %v230
  %232 = vmatprep.mubr.f32.mxu0 0.0
  %233 = vmatmul.mubr.f32.gmra.mxu0 %v46
  %v234 = vpop.f32.mrf.mxu0
  %v235 = vadd.f32 0.0, %v234
  %v236 = vpop.f32.mrf.mxu0
  %v237 = vadd.f32 0.0, %v236
  %238 = vdwg.mxu0
  %vm239 = vcmp.ge.f32.partialorder %v128, 0.0
  %vm240 = vcmp.ge.f32.partialorder %v130, 0.0
  %vm241 = vcmp.ge.f32.partialorder %v217, 0.0
  %vm242 = vcmp.ge.f32.partialorder %v219, 0.0
  %vm243 = vcmp.ge.f32.partialorder %v134, 0.0
  %vm244 = vcmp.ge.f32.partialorder %v136, 0.0
  %vm245 = vcmp.ge.f32.partialorder %v223, 0.0
  %vm246 = vcmp.ge.f32.partialorder %v225, 0.0
  %vm247 = vcmp.ge.f32.partialorder %v140, 0.0
  %vm248 = vcmp.ge.f32.partialorder %v142, 0.0
  %vm249 = vcmp.ge.f32.partialorder %v229, 0.0
  %vm250 = vcmp.ge.f32.partialorder %v231, 0.0
  %vm251 = vcmp.ge.f32.partialorder %v146, 0.0
  %vm252 = vcmp.ge.f32.partialorder %v148, 0.0
  %vm253 = vcmp.ge.f32.partialorder %v235, 0.0
  %vm254 = vcmp.ge.f32.partialorder %v237, 0.0
  %v255 = vmul.f32 %v128, 0.01
  %v256 = vmul.f32 %v130, 0.01
  %v257 = vmul.f32 %v217, 0.01
  %v258 = vmul.f32 %v219, 0.01
  %v259 = vmul.f32 %v134, 0.01
  %v260 = vmul.f32 %v136, 0.01
  %v261 = vmul.f32 %v223, 0.01
  %v262 = vmul.f32 %v225, 0.01
  %v263 = vmul.f32 %v140, 0.01
  %v264 = vmul.f32 %v142, 0.01
  %v265 = vmul.f32 %v229, 0.01
  %v266 = vmul.f32 %v231, 0.01
  %v267 = vmul.f32 %v146, 0.01
  %v268 = vmul.f32 %v148, 0.01
  %v269 = vmul.f32 %v235, 0.01
  %v270 = vmul.f32 %v237, 0.01
  %v271 = vsel %vm239, %v128, %v255
  %v272 = vsel %vm240, %v130, %v256
  %v273 = vsel %vm241, %v217, %v257
  %v274 = vsel %vm242, %v219, %v258
  %v275 = vsel %vm243, %v134, %v259
  %v276 = vsel %vm244, %v136, %v260
  %v277 = vsel %vm245, %v223, %v261
  %v278 = vsel %vm246, %v225, %v262
  %v279 = vsel %vm247, %v140, %v263
  %v280 = vsel %vm248, %v142, %v264
  %v281 = vsel %vm249, %v229, %v265
  %v282 = vsel %vm250, %v231, %v266
  %v283 = vsel %vm251, %v146, %v267
  %v284 = vsel %vm252, %v148, %v268
  %v285 = vsel %vm253, %v235, %v269
  %v286 = vsel %vm254, %v237, %v270
  %287 = vst [vmem:[%s2] sm:$0xff] %v271
  %288 = vst [vmem:[%s2 + $0x8] sm:$0xff] %v272
  %289 = vst [vmem:[%s2 + $0x10] sm:$0xff] %v273
  %290 = vst [vmem:[%s2 + $0x18] sm:$0xff] %v274
  %291 = vst [vmem:[%s2 + $0x20] sm:$0xff] %v275
  %292 = vst [vmem:[%s2 + $0x28] sm:$0xff] %v276
  %293 = vst [vmem:[%s2 + $0x30] sm:$0xff] %v277
  %294 = vst [vmem:[%s2 + $0x38] sm:$0xff] %v278
  %295 = vst [vmem:[%s2 + $0x40] sm:$0xff] %v279
  %296 = vst [vmem:[%s2 + $0x48] sm:$0xff] %v280
  %297 = vst [vmem:[%s2 + $0x50] sm:$0xff] %v281
  %298 = vst [vmem:[%s2 + $0x58] sm:$0xff] %v282
  %299 = vst [vmem:[%s2 + $0x60] sm:$0xff] %v283
  %300 = vst [vmem:[%s2 + $0x68] sm:$0xff] %v284
  %301 = vst [vmem:[%s2 + $0x70] sm:$0xff] %v285
  %302 = vst [vmem:[%s2 + $0x78] sm:$0xff] %v286
  // Predicated region
  $region10: #{upsample_block_forward.1} parent=0 // pred_check
    _
  $region11: #{upsample_block_forward.1} parent=0 // pred_check_branch
    %304 = sbr.rel (0) target = $region13
  $region12: #{upsample_block_forward.1} parent=0 // pred_region
    _
  $region13: #{upsample_block_forward.1} parent=0 // pred_fallthru
    _
  // Predicated region
  $region14: #{upsample_block_forward.1} parent=0 // pred_check
    _
  $region15: #{upsample_block_forward.1} parent=0 // pred_check_branch
    %306 = sbr.rel (0) target = $region17
  $region16: #{upsample_block_forward.1} parent=0 // pred_region
    _
  $region17: #{upsample_block_forward.1} parent=0 // pred_fallthru
    _

</llo_original>
